<compile_context>
chip_gen: v5e
topology: v5e:2x2
jax: 0.10.0
libtpu: 0.0.40
codegen_flags: <defaults>
</compile_context>

<pallas_src>
import functools

import jax
import jax.numpy as jnp
from jax.experimental import pallas as pl
from jax.experimental.pallas import tpu as pltpu


def _temporal_shift_kernel(x_ref, o_ref, *, fold):
    """One (T, C, hw_tile) block: static channel-group slice copies."""
    T, C, HW = x_ref.shape

    if fold > 0:
        # Group 0 (c in [0, fold)): take next frame; zero at t = T-1.
        o_ref[0:T - 1, 0:fold, :] = x_ref[1:T, 0:fold, :]
        o_ref[T - 1:T, 0:fold, :] = jnp.zeros((1, fold, HW), x_ref.dtype)
        # Group 1 (c in [fold, 2*fold)): take previous frame; zero at t = 0.
        o_ref[1:T, fold:2 * fold, :] = x_ref[0:T - 1, fold:2 * fold, :]
        o_ref[0:1, fold:2 * fold, :] = jnp.zeros((1, fold, HW), x_ref.dtype)

    # Group 2 (c >= 2*fold): pass-through.
    if 2 * fold < C:
        o_ref[:, 2 * fold:, :] = x_ref[:, 2 * fold:, :]


def temporal_shift_pallas(x_nchw, n_segment, fold_div,
                          *, target_block_bytes=4 << 20):
    """x_nchw: (nt, c, h, w), nt % n_segment == 0.  Returns same shape."""
    nt, c, h, w = x_nchw.shape
    assert nt % n_segment == 0, "nt must be a multiple of n_segment"
    assert n_segment >= 2, "temporal shift needs at least 2 segments"
    n_batch = nt // n_segment
    fold = c // fold_div
    hw = h * w
    itemsize = jnp.dtype(x_nchw.dtype).itemsize

    # --- Pick a lane-dense HW tile (multiple of 128) sized so the
    #     double-buffered in+out footprint is a few MiB on every generation.
    bytes_per_lane_col = n_segment * c * itemsize
    max_lanes = max(128, (target_block_bytes // bytes_per_lane_col) // 128 * 128)
    hw_tile = min(max_lanes, pl.cdiv(hw, 128) * 128)
    hw_padded = pl.cdiv(hw, hw_tile) * hw_tile
    num_hw_tiles = hw_padded // hw_tile

    # Pure contiguous reshape: spatial dims fuse into the lane axis.
    x5 = x_nchw.reshape(n_batch, n_segment, c, hw)
    if hw_padded != hw:
        x5 = jnp.pad(x5, ((0, 0), (0, 0), (0, 0), (0, hw_padded - hw)))

    kernel = functools.partial(_temporal_shift_kernel, fold=fold)

    block_bytes = n_segment * c * hw_tile * itemsize
    # 2 buffers x (in + out) x block, plus headroom; clamp to be safe on v7x.
    vmem_limit = int(min(96 << 20, max(32 << 20, 6 * block_bytes)))
    total_bytes = n_batch * n_segment * c * hw_padded * itemsize

    out5 = pl.pallas_call(
        kernel,
        out_shape=jax.ShapeDtypeStruct((n_batch, n_segment, c, hw_padded),
                                       x_nchw.dtype),
        grid_spec=pltpu.PrefetchScalarGridSpec(
            num_scalar_prefetch=0,
            grid=(n_batch, num_hw_tiles),
            in_specs=[
                pl.BlockSpec((None, n_segment, c, hw_tile),
                             lambda b, s: (b, 0, 0, s)),
            ],
            out_specs=pl.BlockSpec((None, n_segment, c, hw_tile),
                                   lambda b, s: (b, 0, 0, s)),
        ),
        compiler_params=pltpu.CompilerParams(
            dimension_semantics=("parallel", "parallel"),
            vmem_limit_bytes=vmem_limit),
        cost_estimate=pl.CostEstimate(
            flops=0, transcendentals=0, bytes_accessed=2 * total_bytes),
    )(x5)

    if hw_padded != hw:
        out5 = out5[..., :hw]
    return out5.reshape(nt, c, h, w)


def temporal_shift_reference(x_nchw, n_segment, fold_div):
    """Pure-JAX reference mirroring TemporalShift.shift_basic."""
    nt, c, h, w = x_nchw.shape
    n_batch = nt // n_segment
    fold = c // fold_div
    x5 = x_nchw.reshape(n_batch, n_segment, c, h, w)
    zeros = jnp.zeros((n_batch, 1, fold, h, w), x_nchw.dtype)
    out_l = jnp.concatenate([x5[:, 1:, :fold], zeros], axis=1)
    out_r = jnp.concatenate([zeros, x5[:, :-1, fold:2 * fold]], axis=1)
    out_n = x5[:, :, 2 * fold:]
    out = jnp.concatenate([out_l, out_r, out_n], axis=2)
    return out.reshape(nt, c, h, w)


if __name__ == "__main__":
    key = jax.random.PRNGKey(0)

    n_batch, n_segment = 2, 4          # nt = 8 (matches "seq=8")
    c, h, w = 16, 16, 16
    fold_div = 8                       # module default n_div=8 -> fold = 2
    nt = n_batch * n_segment

    x = jax.random.normal(key, (nt, c, h, w), jnp.float32)

    out = jax.block_until_ready(temporal_shift_pallas(x, n_segment, fold_div))
    ref = jax.block_until_ready(temporal_shift_reference(x, n_segment, fold_div))

    assert out.shape == (nt, c, h, w), out.shape
    assert jnp.allclose(out, ref, atol=0.0, rtol=0.0), \
        float(jnp.max(jnp.abs(out - ref)))

    print("KERNEL_OK")
</pallas_src>

<mosaic_0001>
module attributes {stable_mosaic.version = 11 : i64} {
  func.func @_temporal_shift_kernel(%arg0: i32, %arg1: i32, %arg2: memref<1x4x16x256xf32, #tpu.memory_space<vmem>>, %arg3: memref<1x4x16x256xf32, #tpu.memory_space<vmem>>) attributes {dimension_semantics = [#tpu.dimension_semantics<parallel>, #tpu.dimension_semantics<parallel>], iteration_bounds = array<i64: 2, 1>, scalar_prefetch = 0 : i64, scratch_operands = 0 : i64, tpu.core_type = #tpu.core_type<tc>, window_params = [{transform_indices = @transform_0, window_bounds = array<i64: 1, 4, 16, 256>}, {transform_indices = @transform_1, window_bounds = array<i64: 1, 4, 16, 256>}]} {
    %c0 = arith.constant 0 : index
    %c1 = arith.constant 1 : index
    %c0_0 = arith.constant 0 : index
    %c0_1 = arith.constant 0 : index
    %0 = vector.load %arg2[%c0, %c1, %c0_0, %c0_1] : memref<1x4x16x256xf32, #tpu.memory_space<vmem>>, vector<1x3x2x256xf32>
    %1 = vector.shape_cast %0 : vector<1x3x2x256xf32> to vector<3x2x256xf32>
    %c0_2 = arith.constant 0 : index
    %c0_3 = arith.constant 0 : index
    %c0_4 = arith.constant 0 : index
    %c0_5 = arith.constant 0 : index
    %2 = vector.load %arg3[%c0_2, %c0_3, %c0_4, %c0_5] : memref<1x4x16x256xf32, #tpu.memory_space<vmem>>, vector<1x3x2x256xf32>
    %3 = vector.shape_cast %2 : vector<1x3x2x256xf32> to vector<3x2x256xf32>
    %4 = vector.shape_cast %1 : vector<3x2x256xf32> to vector<1x3x2x256xf32>
    tpu.vector_store %arg3[%c0_2, %c0_3, %c0_4, %c0_5], %4 {strides = array<i32>} : memref<1x4x16x256xf32, #tpu.memory_space<vmem>>, vector<1x3x2x256xf32>,
    %cst = arith.constant 0.000000e+00 : f32
    %5 = vector.broadcast %cst : f32 to vector<1x2x256xf32>
    %c0_6 = arith.constant 0 : index
    %c3 = arith.constant 3 : index
    %c0_7 = arith.constant 0 : index
    %c0_8 = arith.constant 0 : index
    %6 = vector.load %arg3[%c0_6, %c3, %c0_7, %c0_8] : memref<1x4x16x256xf32, #tpu.memory_space<vmem>>, vector<1x1x2x256xf32>
    %7 = vector.shape_cast %6 : vector<1x1x2x256xf32> to vector<1x2x256xf32>
    %8 = vector.shape_cast %5 : vector<1x2x256xf32> to vector<1x1x2x256xf32>
    tpu.vector_store %arg3[%c0_6, %c3, %c0_7, %c0_8], %8 {strides = array<i32>} : memref<1x4x16x256xf32, #tpu.memory_space<vmem>>, vector<1x1x2x256xf32>,
    %c0_9 = arith.constant 0 : index
    %c0_10 = arith.constant 0 : index
    %c2 = arith.constant 2 : index
    %c0_11 = arith.constant 0 : index
    %9 = vector.load %arg2[%c0_9, %c0_10, %c2, %c0_11] : memref<1x4x16x256xf32, #tpu.memory_space<vmem>>, vector<1x3x2x256xf32>
    %10 = vector.shape_cast %9 : vector<1x3x2x256xf32> to vector<3x2x256xf32>
    %c0_12 = arith.constant 0 : index
    %c1_13 = arith.constant 1 : index
    %c2_14 = arith.constant 2 : index
    %c0_15 = arith.constant 0 : index
    %11 = vector.load %arg3[%c0_12, %c1_13, %c2_14, %c0_15] : memref<1x4x16x256xf32, #tpu.memory_space<vmem>>, vector<1x3x2x256xf32>
    %12 = vector.shape_cast %11 : vector<1x3x2x256xf32> to vector<3x2x256xf32>
    %13 = vector.shape_cast %10 : vector<3x2x256xf32> to vector<1x3x2x256xf32>
    tpu.vector_store %arg3[%c0_12, %c1_13, %c2_14, %c0_15], %13 {strides = array<i32>} : memref<1x4x16x256xf32, #tpu.memory_space<vmem>>, vector<1x3x2x256xf32>,
    %cst_16 = arith.constant 0.000000e+00 : f32
    %14 = vector.broadcast %cst_16 : f32 to vector<1x2x256xf32>
    %c0_17 = arith.constant 0 : index
    %c0_18 = arith.constant 0 : index
    %c2_19 = arith.constant 2 : index
    %c0_20 = arith.constant 0 : index
    %15 = vector.load %arg3[%c0_17, %c0_18, %c2_19, %c0_20] : memref<1x4x16x256xf32, #tpu.memory_space<vmem>>, vector<1x1x2x256xf32>
    %16 = vector.shape_cast %15 : vector<1x1x2x256xf32> to vector<1x2x256xf32>
    %17 = vector.shape_cast %14 : vector<1x2x256xf32> to vector<1x1x2x256xf32>
    tpu.vector_store %arg3[%c0_17, %c0_18, %c2_19, %c0_20], %17 {strides = array<i32>} : memref<1x4x16x256xf32, #tpu.memory_space<vmem>>, vector<1x1x2x256xf32>,
    %c0_21 = arith.constant 0 : index
    %c0_22 = arith.constant 0 : index
    %c4 = arith.constant 4 : index
    %c0_23 = arith.constant 0 : index
    %18 = vector.load %arg2[%c0_21, %c0_22, %c4, %c0_23] : memref<1x4x16x256xf32, #tpu.memory_space<vmem>>, vector<1x4x12x256xf32>
    %19 = vector.shape_cast %18 : vector<1x4x12x256xf32> to vector<4x12x256xf32>
    %c0_24 = arith.constant 0 : index
    %c0_25 = arith.constant 0 : index
    %c4_26 = arith.constant 4 : index
    %c0_27 = arith.constant 0 : index
    %20 = vector.load %arg3[%c0_24, %c0_25, %c4_26, %c0_27] : memref<1x4x16x256xf32, #tpu.memory_space<vmem>>, vector<1x4x12x256xf32>
    %21 = vector.shape_cast %20 : vector<1x4x12x256xf32> to vector<4x12x256xf32>
    %22 = vector.shape_cast %19 : vector<4x12x256xf32> to vector<1x4x12x256xf32>
    tpu.vector_store %arg3[%c0_24, %c0_25, %c4_26, %c0_27], %22 {strides = array<i32>} : memref<1x4x16x256xf32, #tpu.memory_space<vmem>>, vector<1x4x12x256xf32>,
    return
  }
  func.func @transform_0(%arg0: i32, %arg1: i32) -> (i32, i32, i32, i32) {
    %c0_i32 = arith.constant 0 : i32
    %c0_i32_0 = arith.constant 0 : i32
    %c0_i32_1 = arith.constant 0 : i32
    return %arg0, %c0_i32, %c0_i32_0, %arg1 : i32, i32, i32, i32
  }
  func.func @transform_1(%arg0: i32, %arg1: i32) -> (i32, i32, i32, i32) {
    %c0_i32 = arith.constant 0 : i32
    %c0_i32_0 = arith.constant 0 : i32
    %c0_i32_1 = arith.constant 0 : i32
    return %arg0, %c0_i32, %c0_i32_0, %arg1 : i32, i32, i32, i32
  }
}

</mosaic_0001>

<llo_original>
// kernel: tpu_custom_call.1
$region0: #{tpu_custom_call.1}
  #allocation0 [shape = 'u32[]', space=smem, size = 0x4, offset = 0x4, fixed_abs, tag = 'smem constant byte address 0x4 - core index']
  #allocation1 [shape = 'u32[72,128]{1,0:T(1,128)}', space=vmem, size = 0x9000, scoped, tag = 'internal scratch']
  %s0 = inlined_call_operand.hbm [shape: f32[2,4,16,256], index: 0, kind: input, shape index: {}]
  %s1 = inlined_call_operand.hbm [shape: f32[2,4,16,256], index: 1, kind: output, shape index: {}]
  %s2 = sld [smem:[#allocation0]]
  $region41: #{tpu_custom_call.1} parent=0
    _
  %s4 = ssub.s32 1, %s2
  %s5 = scalar_select 0, %s4, %s2
  $region1: #{tpu_custom_call.1} parent=0
    #allocation2 [shape = 'u8[131072]{0}', space=vmem, size = 0x20000, scoped, tag = 'input window, operand 0']
    #allocation3 [shape = 's32[2]{0}', space=sflag, size = 0x8, scoped, tag = 'scoped memory for tpu_custom_call.1']
    #allocation4 [shape = 's32[2]{0}', space=sflag, size = 0x8, scoped, tag = 'scoped memory for tpu_custom_call.1']
    #allocation5 [shape = 'u8[131072]{0}', space=vmem, size = 0x20000, scoped, tag = 'output window, operand 0']
    %6 = vsyncpa [#allocation3], 0
    %s7 = scalar_lea.sflag [#allocation3], 1
    %8 = vsyncpa %s7, 0
    %9 = vsyncpa [#allocation4], 0
    %s10 = scalar_lea.sflag [#allocation4], 1
    %11 = vsyncpa %s10, 0
    loop: start=0, step=1, limit=4
    $region2: #{tpu_custom_call.1} parent=1 // loop_pre_header
      _
    $region3: #{tpu_custom_call.1} parent=1 // loop_header
      %s13 = sphi 0, %s17
      %p14 = scmp.ge.s32.totalorder %s13, 4
      %s20 = sphi 0, %s32
      %s21 = sphi 0, %s28
      %s22 = sphi 0, %s20
      %s23 = sphi 0, %s21
      %s24 = sphi 0, %s22
      %s25 = sphi 0, %s23
      %s37 = sphi 0, %s39
      %s40 = sphi 0, %s37
      %s41 = sphi 0, %s40
      %s57 = sphi 0, %s41
      %s65 = sphi 0, %s67
      %s68 = sphi 0, %s65
      %s69 = sphi 0, %s68
      %s85 = sphi 0, %s69
    $region4: #{tpu_custom_call.1} parent=1 // loop_header_branch
      %16 = sbr.rel (%p14) target = $region8
    $region5: #{tpu_custom_call.1} parent=1 // loop_body
      %s18 = ssub.s32 %s13, 1
      %s19 = ssub.s32 %s13, 2
      %s26 = sadd.s32 1, %s21
      %p27 = scmp.ge.s32.totalorder %s26, 1
      %s28 = scalar_select %p27, 0, %s26
      %s29 = sadd.s32 1, %s20
      %s30 = scalar_select %p27, %s29, %s20
      %p31 = scmp.ge.s32.totalorder %s30, 2
      %s32 = scalar_select %p31, 0, %s30
      %s33 = ssub.s32 %s20, %s32
      %s34 = ssub.s32 %s21, %s28
      %s35 = sor.u32 %s33, %s34
      %p36 = scmp.eq.s32.totalorder %s35, 0
      %s38 = sadd.s32 %s37, 1
      %s39 = scalar_select %p36, %s37, %s38
      %p42 = pneg %p36
      %p43 = scmp.eq.s32.totalorder %s13, 1
      %p44 = por %p42, %p43
      %p45 = scmp.ne.s32.totalorder %s37, %s40
      %p46 = scmp.eq.s32.totalorder %s13, 0
      %p47 = por %p45, %p46
      %p48 = scmp.ne.s32.totalorder %s37, %s40
      %p49 = scmp.eq.s32.totalorder %s18, 1
      %p50 = por %p48, %p49
      %p51 = scmp.ne.s32.totalorder %s40, %s41
      %p52 = scmp.eq.s32.totalorder %s18, 0
      %p53 = por %p51, %p52
      %p54 = scmp.ne.s32.totalorder %s40, %s41
      %p55 = scmp.eq.s32.totalorder %s19, 1
      %p56 = por %p54, %p55
      %p58 = scmp.ne.s32.totalorder %s41, %s57
      %p59 = scmp.eq.s32.totalorder %s19, 0
      %p60 = por %p58, %p59
      %s61 = ssub.s32 %s20, %s32
      %s62 = ssub.s32 %s21, %s28
      %s63 = sor.u32 %s61, %s62
      %p64 = scmp.eq.s32.totalorder %s63, 0
      %s66 = sadd.s32 %s65, 1
      %s67 = scalar_select %p64, %s65, %s66
      %p70 = pneg %p64
      %p71 = scmp.eq.s32.totalorder %s13, 1
      %p72 = por %p70, %p71
      %p73 = scmp.ne.s32.totalorder %s65, %s68
      %p74 = scmp.eq.s32.totalorder %s13, 0
      %p75 = por %p73, %p74
      %p76 = scmp.ne.s32.totalorder %s65, %s68
      %p77 = scmp.eq.s32.totalorder %s18, 1
      %p78 = por %p76, %p77
      %p79 = scmp.ne.s32.totalorder %s68, %s69
      %p80 = scmp.eq.s32.totalorder %s18, 0
      %p81 = por %p79, %p80
      %p82 = scmp.ne.s32.totalorder %s68, %s69
      %p83 = scmp.eq.s32.totalorder %s19, 1
      %p84 = por %p82, %p83
      %p86 = scmp.ne.s32.totalorder %s69, %s85
      %p87 = scmp.eq.s32.totalorder %s19, 0
      %p88 = por %p86, %p87
      %p89 = scmp.le.s32.totalorder 1, %s13
      %p90 = scmp.lt.s32.totalorder %s13, 3
      %p91 = pnand %p89, %p90
      %p92 = pneg %p91
      // Predicated region
      $region9: #{tpu_custom_call.1} parent=5 // pred_check
        _
      $region10: #{tpu_custom_call.1} parent=5 // pred_check_branch
        %94 = sbr.rel (%p91) target = $region12
      $region11: #{tpu_custom_call.1} parent=5 // pred_region
        %s95 = ssub.s32 %s13, 1
      $region12: #{tpu_custom_call.1} parent=5 // pred_fallthru
        _
      %p96 = scmp.lt.s32.totalorder %s13, 2
      // Predicated region
      $region13: #{tpu_custom_call.1} parent=5 // pred_check
        %p97 = pneg %p96
      $region14: #{tpu_custom_call.1} parent=5 // pred_check_branch
        %99 = sbr.rel (%p97) target = $region16
      $region15: #{tpu_custom_call.1} parent=5 // pred_region
        // Predicated region
        $region17: #{tpu_custom_call.1} parent=15 // pred_check
          %p100 = pneg %p47
        $region18: #{tpu_custom_call.1} parent=15 // pred_check_branch
          %102 = sbr.rel (%p100) target = $region20
        $region19: #{tpu_custom_call.1} parent=15 // pred_region
          %s103 = sand.u32 %s37, 1
          %s104 = scalar_lea.sflag [#allocation3], %s103
          %s105 = sand.u32 %s37, 1
          %s106 = smul.addr %s105, 128
          %s107 = scalar_lea.vmem [#allocation2], %s106
          %s108 = smul.u32 2, %s21
          %110 = vsyncadd %s104, 0
          %s111 = smul.addr %s20, 16
          %s112 = sadd.s32 %s108, %s111
          %s113 = smul.addr %s112, 8
          %s114 = scalar_lea.hbm %s0, %s113
          %s115 = sshll.u32 %s114, 4
          %s116 = int_to_ptr.hbm [resolvable:$true] %s115
          %s117 = sshll.u32 %s107, 4
          %s118 = int_to_ptr.vmem [resolvable:$true] %s117
          %123 = dma.hbm_to_vmem [thread:$0]  %s116, 2048, %s118, %s104, 256, 256, 16
        $region20: #{tpu_custom_call.1} parent=15 // pred_fallthru
          _
      $region16: #{tpu_custom_call.1} parent=5 // pred_fallthru
        _
      %p124 = scmp.le.s32.totalorder 1, %s13
      %p125 = scmp.lt.s32.totalorder %s13, 3
      %p126 = pnand %p124, %p125
      %p127 = pneg %p126
      // Predicated region
      $region21: #{tpu_custom_call.1} parent=5 // pred_check
        _
      $region22: #{tpu_custom_call.1} parent=5 // pred_check_branch
        %129 = sbr.rel (%p126) target = $region24
      $region23: #{tpu_custom_call.1} parent=5 // pred_region
        %s130 = ssub.s32 %s13, 1
        %s131 = sand.u32 %s40, 1
        %s132 = scalar_lea.sflag [#allocation3], %s131
        %s133 = sand.u32 %s40, 1
        %s134 = smul.addr %s133, 128
        %s135 = scalar_lea.vmem [#allocation2], %s134
        // Predicated region
        $region25: #{tpu_custom_call.1} parent=23 // pred_check
          %p136 = pneg %p53
        $region26: #{tpu_custom_call.1} parent=23 // pred_check_branch
          %138 = sbr.rel (%p136) target = $region28
        $region27: #{tpu_custom_call.1} parent=23 // pred_region
          %140 = dma.done %s132, 2048
        $region28: #{tpu_custom_call.1} parent=23 // pred_fallthru
          _
        %s141 = sand.u32 %s40, 1
        %s142 = scalar_lea.sflag [#allocation3], %s141
        %s143 = sand.u32 %s40, 1
        %s144 = smul.addr %s143, 128
        %s145 = scalar_lea.vmem [#allocation2], %s144
        %p146 = pneg %p53
        %p147 = pneg %p50
        %p148 = pneg %p81
        %p149 = pneg %p78
        %s150 = sand.u32 %s68, 1
        %s151 = scalar_lea.sflag [#allocation4], %s150
        %s152 = sand.u32 %s68, 1
        %s153 = smul.addr %s152, 128
        %s154 = scalar_lea.vmem [#allocation5], %s153
        %s155 = smul.u32 2, %s23
        %s156 = smul.u32 2, %s23
        %s157 = scalar_lea.vmem %s135, 32 [#allocation2]
        %v158 = vld [vmem:[%s157] sm:$0x3]
        %v159 = vld [vmem:[%s157 + $0x8] sm:$0x3]
        %v160 = vld [vmem:[%s157 + $0x20] sm:$0x3]
        %v161 = vld [vmem:[%s157 + $0x28] sm:$0x3]
        %v162 = vld [vmem:[%s157 + $0x40] sm:$0x3]
        %v163 = vld [vmem:[%s157 + $0x48] sm:$0x3]
        %164 = vst [vmem:[%s154] sm:$0x3] %v158
        %165 = vst [vmem:[%s154 + $0x8] sm:$0x3] %v159
        %166 = vst [vmem:[%s154 + $0x20] sm:$0x3] %v160
        %167 = vst [vmem:[%s154 + $0x28] sm:$0x3] %v161
        %168 = vst [vmem:[%s154 + $0x40] sm:$0x3] %v162
        %169 = vst [vmem:[%s154 + $0x48] sm:$0x3] %v163
        %s170 = scalar_lea.vmem %s154, 96 [#allocation5]
        %171 = vst [vmem:[%s170] sm:$0x3] 0.0
        %172 = vst [vmem:[%s170 + $0x8] sm:$0x3] 0.0
        %v173 = vld [vmem:[%s135] sm:$0xc]
        %v174 = vld [vmem:[%s135 + $0x8] sm:$0xc]
        %v175 = vld [vmem:[%s135 + $0x20] sm:$0xc]
        %v176 = vld [vmem:[%s135 + $0x28] sm:$0xc]
        %v177 = vld [vmem:[%s135 + $0x40] sm:$0xc]
        %v178 = vld [vmem:[%s135 + $0x48] sm:$0xc]
        %s179 = scalar_lea.vmem %s154, 32 [#allocation5]
        %180 = vst [vmem:[%s179] sm:$0xc] %v173
        %181 = vst [vmem:[%s179 + $0x8] sm:$0xc] %v174
        %182 = vst [vmem:[%s179 + $0x20] sm:$0xc] %v175
        %183 = vst [vmem:[%s179 + $0x28] sm:$0xc] %v176
        %184 = vst [vmem:[%s179 + $0x40] sm:$0xc] %v177
        %185 = vst [vmem:[%s179 + $0x48] sm:$0xc] %v178
        %186 = vst [vmem:[%s154] sm:$0xc] 0.0
        %187 = vst [vmem:[%s154 + $0x8] sm:$0xc] 0.0
        %v188 = vld [vmem:[%s135] sm:$0xf0]
        %v189 = vld [vmem:[%s135 + $0x8] sm:$0xf0]
        %v190 = vld [vmem:[%s135 + $0x10] sm:$0xff]
        %v191 = vld [vmem:[%s135 + $0x18] sm:$0xff]
        %v192 = vld [vmem:[%s135 + $0x20] sm:$0xf0]
        %v193 = vld [vmem:[%s135 + $0x28] sm:$0xf0]
        %v194 = vld [vmem:[%s135 + $0x30] sm:$0xff]
        %v195 = vld [vmem:[%s135 + $0x38] sm:$0xff]
        %v196 = vld [vmem:[%s135 + $0x40] sm:$0xf0]
        %v197 = vld [vmem:[%s135 + $0x48] sm:$0xf0]
        %v198 = vld [vmem:[%s135 + $0x50] sm:$0xff]
        %v199 = vld [vmem:[%s135 + $0x58] sm:$0xff]
        %v200 = vld [vmem:[%s135 + $0x60] sm:$0xf0]
        %v201 = vld [vmem:[%s135 + $0x68] sm:$0xf0]
        %v202 = vld [vmem:[%s135 + $0x70] sm:$0xff]
        %v203 = vld [vmem:[%s135 + $0x78] sm:$0xff]
        %204 = vst [vmem:[%s154] sm:$0xf0] %v188
        %205 = vst [vmem:[%s154 + $0x8] sm:$0xf0] %v189
        %206 = vst [vmem:[%s154 + $0x10] sm:$0xff] %v190
        %207 = vst [vmem:[%s154 + $0x18] sm:$0xff] %v191
        %208 = vst [vmem:[%s154 + $0x20] sm:$0xf0] %v192
        %209 = vst [vmem:[%s154 + $0x28] sm:$0xf0] %v193
        %210 = vst [vmem:[%s154 + $0x30] sm:$0xff] %v194
        %211 = vst [vmem:[%s154 + $0x38] sm:$0xff] %v195
        %212 = vst [vmem:[%s154 + $0x40] sm:$0xf0] %v196
        %213 = vst [vmem:[%s154 + $0x48] sm:$0xf0] %v197
        %214 = vst [vmem:[%s154 + $0x50] sm:$0xff] %v198
        %215 = vst [vmem:[%s154 + $0x58] sm:$0xff] %v199
        %216 = vst [vmem:[%s154 + $0x60] sm:$0xf0] %v200
        %217 = vst [vmem:[%s154 + $0x68] sm:$0xf0] %v201
        %218 = vst [vmem:[%s154 + $0x70] sm:$0xff] %v202
        %219 = vst [vmem:[%s154 + $0x78] sm:$0xff] %v203
        %s220 = sand.u32 %s68, 1
        %s221 = scalar_lea.sflag [#allocation4], %s220
        %s222 = sand.u32 %s68, 1
        %s223 = smul.addr %s222, 128
        %s224 = scalar_lea.vmem [#allocation5], %s223
        // Predicated region
        $region29: #{tpu_custom_call.1} parent=23 // pred_check
          %p225 = pneg %p78
        $region30: #{tpu_custom_call.1} parent=23 // pred_check_branch
          %227 = sbr.rel (%p225) target = $region32
        $region31: #{tpu_custom_call.1} parent=23 // pred_region
          %s228 = smul.u32 2, %s23
          %230 = vsyncadd %s221, 0
          %s231 = smul.addr %s22, 16
          %s232 = sadd.s32 %s228, %s231
          %s233 = smul.addr %s232, 8
          %s234 = scalar_lea.hbm %s1, %s233
          %s235 = sshll.u32 %s224, 4
          %s236 = int_to_ptr.vmem [resolvable:$true] %s235
          %s237 = sshll.u32 %s234, 4
          %s238 = int_to_ptr.hbm [resolvable:$true] %s237
          %243 = dma.vmem_to_hbm [thread:$0]  %s236, 2048, %s238, %s221, 256, 256, 16
        $region32: #{tpu_custom_call.1} parent=23 // pred_fallthru
          _
      $region24: #{tpu_custom_call.1} parent=5 // pred_fallthru
        _
      %p244 = scmp.le.s32.totalorder 2, %s13
      // Predicated region
      $region33: #{tpu_custom_call.1} parent=5 // pred_check
        %p245 = pneg %p244
      $region34: #{tpu_custom_call.1} parent=5 // pred_check_branch
        %247 = sbr.rel (%p245) target = $region36
      $region35: #{tpu_custom_call.1} parent=5 // pred_region
        %s248 = ssub.s32 %s13, 2
        // Predicated region
        $region37: #{tpu_custom_call.1} parent=35 // pred_check
          %p249 = pneg %p84
        $region38: #{tpu_custom_call.1} parent=35 // pred_check_branch
          %251 = sbr.rel (%p249) target = $region40
        $region39: #{tpu_custom_call.1} parent=35 // pred_region
          %s252 = sand.u32 %s69, 1
          %s253 = scalar_lea.sflag [#allocation4], %s252
          %s254 = sand.u32 %s69, 1
          %s255 = smul.addr %s254, 128
          %s256 = scalar_lea.vmem [#allocation5], %s255
          %258 = dma.done %s253, 2048
        $region40: #{tpu_custom_call.1} parent=35 // pred_fallthru
          _
      $region36: #{tpu_custom_call.1} parent=5 // pred_fallthru
        _
    $region6: #{tpu_custom_call.1} parent=1 // loop_footer
      %s17 = sadd.s32 1, %s13
    $region7: #{tpu_custom_call.1} parent=1 // loop_footer_branch
      %12 = sbr.rel target = $region3
    $region8: #{tpu_custom_call.1} parent=1 // loop_exit
      _
    %259 = vsyncpa [#allocation3], 1
    %s260 = scalar_lea.sflag [#allocation3], 1
    %261 = vsyncpa %s260, 1
    %262 = vsyncpa [#allocation4], 1
    %s263 = scalar_lea.sflag [#allocation4], 1
    %264 = vsyncpa %s263, 1

</llo_original>
